<compile_context>
chip_gen: v7x
topology: tpu7x:2x2x1
jax: 0.10.0
libtpu: 0.0.40
codegen_flags: <defaults>
</compile_context>

<pallas_src>
import functools

import jax
import jax.numpy as jnp
from jax.experimental import pallas as pl
from jax.experimental.pallas import tpu as pltpu

LANE = 128


def _round_up(x: int, m: int) -> int:
    return ((x + m - 1) // m) * m


@functools.lru_cache(maxsize=1)
def _vmem_budget_and_limit():
    """Generation-aware (working-set budget, vmem_limit_bytes)."""
    cap = 64 * 1024 * 1024  # conservative default: v7x-class 64 MiB / TensorCore
    try:
        cap = int(pltpu.get_tpu_info().vmem_capacity_bytes)
    except Exception:
        pass
    if cap >= 96 * 1024 * 1024:                      # v5e / v6e: 128 MiB VMEM
        return 64 * 1024 * 1024, 100 * 1024 * 1024
    return 26 * 1024 * 1024, 40 * 1024 * 1024        # v7x-class: 64 MiB / TC


def _pick_tile(dim: int, quantum: int, cap: int):
    """Pick (tile, padded_dim) for one GEMM dim.

    tile is a multiple of `quantum`.  Preference: a single tile covering the whole
    (quantum-rounded) dim if <= cap; else the largest tile <= cap dividing the rounded
    dim (zero padding waste); else cap with round-up padding.
    """
    d = _round_up(max(dim, 1), quantum)
    if d <= cap:
        return d, d
    t = (cap // quantum) * quantum
    while t >= quantum:
        if d % t == 0:
            return t, d
        t -= quantum
    t = (cap // quantum) * quantum
    return t, _round_up(d, t)


def _select_tiles(out_c, k_dim, hw, in_bytes, budget):
    """Tile (OutC, K, Ho*Wo) for the per-image GEMM  W(OutC,K) @ P(K,HW)."""
    toc, oc_pad = _pick_tile(out_c, 16, 512)          # sublane dim of the output
    tk = k_pad = thw = hw_pad = None
    # Prefer a single K step (no accumulator / no VMEM read-modify-write), then the
    # widest lane-dense HW tile that fits the working-set budget.
    for tk_cap, thw_cap in ((8192, 2048), (4096, 2048), (4096, 1024), (2048, 1024),
                            (2048, 512), (1024, 512), (512, 512), (512, 256),
                            (256, 256), (256, 128), (128, 128)):
        tk, k_pad = _pick_tile(k_dim, LANE, tk_cap)
        thw, hw_pad = _pick_tile(hw, LANE, thw_cap)
        vmem = (2 * in_bytes * (toc * tk + tk * thw)   # double-buffered bf16 inputs
                + 3 * 4 * toc * thw                    # f32 out (x2 buffers) + accumulator
                + 2 * 4 * toc * LANE)                  # bias (lane-padded)
        if vmem <= budget:
            break
    return toc, oc_pad, tk, k_pad, thw, hw_pad


def _conv_gemm_kernel(w_ref, p_ref, b_ref, o_ref):
    """Single K step: o = W_tile @ P_tile + bias  (no accumulator scratch needed)."""
    o_ref[...] = (
        jnp.dot(w_ref[...], p_ref[...], preferred_element_type=jnp.float32)
        + b_ref[...]
    ).astype(o_ref.dtype)


def _conv_gemm_acc_kernel(w_ref, p_ref, b_ref, o_ref, acc_ref):
    """Grid = (batch, OutC tiles, HW tiles, K tiles); accumulate over K (last axis)."""
    kk = pl.program_id(3)

    @pl.when(kk == 0)
    def _init():
        acc_ref[...] = jnp.zeros_like(acc_ref)

    acc_ref[...] += jnp.dot(w_ref[...], p_ref[...], preferred_element_type=jnp.float32)

    @pl.when(kk == pl.num_programs(3) - 1)
    def _finalize():
        o_ref[...] = (acc_ref[...] + b_ref[...]).astype(o_ref.dtype)


@functools.partial(jax.jit, static_argnames=("stride", "padding", "compute_dtype"))
def my_conv2d_forward(x, weight, bias, stride, padding, compute_dtype=jnp.bfloat16):
    """Forward pass matching MyConv2d.forward.

    x:      (N, InC, H, W)      float32, NCHW
    weight: (OutC, InC, kH, kW) float32
    bias:   (OutC,)             float32
    stride: (h_stride, w_stride)
    padding:(pad_left, pad_right, pad_up, pad_down)  -- nn.ZeroPad2d convention
    returns (N, OutC, H_out, W_out) float32
    """
    pad_l, pad_r, pad_u, pad_d = padding
    h_stride, w_stride = stride
    out_c, in_c, kh, kw = weight.shape
    n = x.shape[0]

    if h_stride <= 0 or w_stride <= 0:
        raise ValueError(f"strides must be positive, got {stride}")

    # nn.ZeroPad2d(padding): W axis gets (left, right), H axis gets (up, down).
    x_pad = jnp.pad(x, ((0, 0), (0, 0), (pad_u, pad_d), (pad_l, pad_r)))
    hp, wp = x_pad.shape[2], x_pad.shape[3]
    h_out = (hp - kh) // h_stride + 1
    w_out = (wp - kw) // w_stride + 1
    if h_out <= 0 or w_out <= 0:
        raise ValueError(f"degenerate output spatial shape ({h_out}, {w_out})")

    hw = h_out * w_out
    k_dim = in_c * kh * kw

    # NCHW-native im2col (reshapes only; no transposes).
    # cols[n, c, j*kw+i, oy, ox] = x_pad[n, c, oy*sh + j, ox*sw + i]
    # TODO(synk): fuse this extraction into the kernel to avoid the kh*kw HBM blow-up.
    cols = jnp.stack(
        [
            x_pad[:, :, j : j + h_stride * h_out : h_stride,
                        i : i + w_stride * w_out : w_stride]
            for j in range(kh)
            for i in range(kw)
        ],
        axis=2,
    )                                                     # (N, C, kh*kw, Ho, Wo)
    patches = cols.reshape(n, k_dim, hw)                  # (N, K, Ho*Wo), contiguous reshape
    w_mat = weight.reshape(out_c, k_dim)                  # (OutC, K), free reshape

    in_bytes = jnp.dtype(compute_dtype).itemsize
    budget, vmem_limit = _vmem_budget_and_limit()
    toc, oc_pad, tk, k_pad, thw, hw_pad = _select_tiles(out_c, k_dim, hw, in_bytes, budget)
    n_k = k_pad // tk

    # Pad to tile multiples (zeros contribute nothing to the dot; padded rows/cols of the
    # output are sliced off afterwards) and cast MXU operands to the compute dtype.
    w_p = jnp.pad(w_mat.astype(compute_dtype),
                  ((0, oc_pad - out_c), (0, k_pad - k_dim)))
    p_p = jnp.pad(patches.astype(compute_dtype),
                  ((0, 0), (0, k_pad - k_dim), (0, hw_pad - hw)))
    b_p = jnp.pad(bias.astype(jnp.float32), (0, oc_pad - out_c)).reshape(oc_pad, 1)

    grid_base = (n, oc_pad // toc, hw_pad // thw)

    if n_k == 1:
        out_p = pl.pallas_call(
            _conv_gemm_kernel,
            out_shape=jax.ShapeDtypeStruct((n, oc_pad, hw_pad), jnp.float32),
            grid_spec=pltpu.PrefetchScalarGridSpec(
                num_scalar_prefetch=0,
                grid=grid_base,
                in_specs=[
                    # Weight index_map ignores batch/HW axes -> only re-DMA'd when the
                    # OutC tile changes (resident in the common single-tile case).
                    pl.BlockSpec((toc, tk), lambda b, jo, jq: (jo, 0)),
                    pl.BlockSpec((None, tk, thw), lambda b, jo, jq: (b, 0, jq)),
                    pl.BlockSpec((toc, 1), lambda b, jo, jq: (jo, 0)),
                ],
                out_specs=pl.BlockSpec((None, toc, thw), lambda b, jo, jq: (b, jo, jq)),
            ),
            compiler_params=pltpu.CompilerParams(
                dimension_semantics=("parallel", "parallel", "parallel"),
                vmem_limit_bytes=vmem_limit,
            ),
        )(w_p, p_p, b_p)
    else:
        out_p = pl.pallas_call(
            _conv_gemm_acc_kernel,
            out_shape=jax.ShapeDtypeStruct((n, oc_pad, hw_pad), jnp.float32),
            grid_spec=pltpu.PrefetchScalarGridSpec(
                num_scalar_prefetch=0,
                grid=grid_base + (n_k,),
                in_specs=[
                    pl.BlockSpec((toc, tk), lambda b, jo, jq, kk: (jo, kk)),
                    pl.BlockSpec((None, tk, thw), lambda b, jo, jq, kk: (b, kk, jq)),
                    pl.BlockSpec((toc, 1), lambda b, jo, jq, kk: (jo, 0)),
                ],
                out_specs=pl.BlockSpec((None, toc, thw),
                                       lambda b, jo, jq, kk: (b, jo, jq)),
                scratch_shapes=[pltpu.VMEM((toc, thw), jnp.float32)],
            ),
            compiler_params=pltpu.CompilerParams(
                dimension_semantics=("parallel", "parallel", "parallel", "arbitrary"),
                vmem_limit_bytes=vmem_limit,
            ),
        )(w_p, p_p, b_p)

    # (N, OutC_pad, HW_pad) -> NCHW directly; no output transpose needed.
    y = out_p[:, :out_c, :hw].reshape(n, out_c, h_out, w_out)
    return y


if __name__ == "__main__":
    # Small shapes consistent with the module's forward.
    batch, in_channel, out_channel = 2, 4, 8
    H = W = 16
    kernel = (3, 3)
    stride = (2, 2)
    padding = (1, 1, 1, 1)  # (left, right, up, down)

    key = jax.random.PRNGKey(0)
    kx, kw_, kb = jax.random.split(key, 3)
    x = jax.random.normal(kx, (batch, in_channel, H, W), dtype=jnp.float32)
    # Module inits weight/bias with torch.rand (uniform [0,1)); mirror that deterministically.
    weight = jax.random.uniform(kw_, (out_channel, in_channel) + kernel, dtype=jnp.float32)
    bias = jax.random.uniform(kb, (out_channel,), dtype=jnp.float32)

    y = my_conv2d_forward(x, weight, bias, stride, padding)
    y = jax.block_until_ready(y)

    # Reference: XLA conv with the same semantics (asymmetric padding + stride + bias),
    # computed on the same bf16-quantized operands the kernel feeds the MXU (accumulation
    # stays f32 in both), so the comparison isolates kernel correctness from the
    # documented bf16-input precision tradeoff.
    xq = x.astype(jnp.bfloat16).astype(jnp.float32)
    wq = weight.astype(jnp.bfloat16).astype(jnp.float32)
    ref = jax.lax.conv_general_dilated(
        xq, wq,
        window_strides=stride,
        padding=((padding[2], padding[3]), (padding[0], padding[1])),
        dimension_numbers=("NCHW", "OIHW", "NCHW"),
    ) + bias[None, :, None, None]
    assert y.shape == ref.shape, (y.shape, ref.shape)
    assert jnp.allclose(y, ref, atol=2e-3, rtol=2e-3), float(jnp.max(jnp.abs(y - ref)))

    print("KERNEL_OK")
</pallas_src>

<mosaic_0001>
module attributes {stable_mosaic.version = 11 : i64} {
  func.func @_conv_gemm_kernel(%arg0: i32, %arg1: i32, %arg2: i32, %arg3: memref<16x128xbf16, #tpu.memory_space<vmem>>, %arg4: memref<1x128x128xbf16, #tpu.memory_space<vmem>>, %arg5: memref<16x1xf32, #tpu.memory_space<vmem>>, %arg6: memref<1x16x128xf32, #tpu.memory_space<vmem>>) attributes {dimension_semantics = [#tpu.dimension_semantics<parallel>, #tpu.dimension_semantics<parallel>, #tpu.dimension_semantics<parallel>], iteration_bounds = array<i64: 2, 1, 1>, scalar_prefetch = 0 : i64, scratch_operands = 0 : i64, tpu.core_type = #tpu.core_type<tc>, window_params = [{transform_indices = @transform_0, window_bounds = array<i64: 16, 128>}, {transform_indices = @transform_1, window_bounds = array<i64: 1, 128, 128>}, {transform_indices = @transform_2, window_bounds = array<i64: 16, 1>}, {transform_indices = @transform_3, window_bounds = array<i64: 1, 16, 128>}]} {
    %c0 = arith.constant 0 : index
    %c0_0 = arith.constant 0 : index
    %0 = vector.load %arg3[%c0, %c0_0] : memref<16x128xbf16, #tpu.memory_space<vmem>>, vector<16x128xbf16>
    %c0_1 = arith.constant 0 : index
    %c0_2 = arith.constant 0 : index
    %c0_3 = arith.constant 0 : index
    %1 = vector.load %arg4[%c0_1, %c0_2, %c0_3] : memref<1x128x128xbf16, #tpu.memory_space<vmem>>, vector<1x128x128xbf16>
    %2 = vector.shape_cast %1 : vector<1x128x128xbf16> to vector<128x128xbf16>
    %cst = arith.constant dense<0.000000e+00> : vector<16x128xf32>
    %3 = tpu.matmul %0, %2, %cst {dimension_numbers = #tpu.dot_dimension_numbers<[1], [0], [0], [1], [0, 0, 1, 1], [], []>} : vector<16x128xbf16>, vector<128x128xbf16>, vector<16x128xf32> -> vector<16x128xf32>
    %c0_4 = arith.constant 0 : index
    %c0_5 = arith.constant 0 : index
    %4 = vector.load %arg5[%c0_4, %c0_5] : memref<16x1xf32, #tpu.memory_space<vmem>>, vector<16x1xf32>
    %5 = vector.broadcast %4 : vector<16x1xf32> to vector<16x128xf32>
    %6 = arith.addf %3, %5 : vector<16x128xf32>
    %c0_6 = arith.constant 0 : index
    %c0_7 = arith.constant 0 : index
    %c0_8 = arith.constant 0 : index
    %7 = vector.load %arg6[%c0_6, %c0_7, %c0_8] : memref<1x16x128xf32, #tpu.memory_space<vmem>>, vector<1x16x128xf32>
    %8 = vector.shape_cast %7 : vector<1x16x128xf32> to vector<16x128xf32>
    %9 = vector.shape_cast %6 : vector<16x128xf32> to vector<1x16x128xf32>
    tpu.vector_store %arg6[%c0_6, %c0_7, %c0_8], %9 {strides = array<i32>} : memref<1x16x128xf32, #tpu.memory_space<vmem>>, vector<1x16x128xf32>,
    return
  }
  func.func @transform_0(%arg0: i32, %arg1: i32, %arg2: i32) -> (i32, i32) {
    %c0_i32 = arith.constant 0 : i32
    %c0_i32_0 = arith.constant 0 : i32
    return %arg1, %c0_i32 : i32, i32
  }
  func.func @transform_1(%arg0: i32, %arg1: i32, %arg2: i32) -> (i32, i32, i32) {
    %c0_i32 = arith.constant 0 : i32
    %c0_i32_0 = arith.constant 0 : i32
    return %arg0, %c0_i32, %arg2 : i32, i32, i32
  }
  func.func @transform_2(%arg0: i32, %arg1: i32, %arg2: i32) -> (i32, i32) {
    %c0_i32 = arith.constant 0 : i32
    %c0_i32_0 = arith.constant 0 : i32
    return %arg1, %c0_i32 : i32, i32
  }
  func.func @transform_3(%arg0: i32, %arg1: i32, %arg2: i32) -> (i32, i32, i32) {
    %c0_i32 = arith.constant 0 : i32
    return %arg0, %arg1, %arg2 : i32, i32, i32
  }
}

</mosaic_0001>

<llo_original>
// kernel: my_conv2d_forward.1
$region0: #{my_conv2d_forward.1}
  #allocation0 [shape = 'u32[]', space=smem, size = 0x4, offset = 0x4, fixed_abs, tag = 'smem constant byte address 0x4 - core index']
  #allocation1 [shape = 'u32[144,128]{1,0:T(1,128)}', space=vmem, size = 0x12000, scoped, tag = 'internal scratch']
  %s0 = inlined_call_operand.vmem [shape: bf16[16,128], index: 0, kind: input, shape index: {}]
  %s1 = inlined_call_operand.vmem [shape: bf16[2,128,128], index: 1, kind: input, shape index: {}]
  %s2 = inlined_call_operand.vmem [shape: f32[16,1], index: 2, kind: input, shape index: {}]
  %s3 = inlined_call_operand.vmem [shape: f32[2,16,128], index: 3, kind: output, shape index: {}]
  %s4 = sld [smem:[#allocation0]]
  $region45: #{my_conv2d_forward.1} parent=0
    _
  %s6 = ssub.s32 1, %s4
  %s7 = scalar_select 0, %s6, %s4
  loop: start=0, step=1, limit=4
  $region2: #{my_conv2d_forward.1} parent=0 // loop_pre_header
    _
  $region3: #{my_conv2d_forward.1} parent=0 // loop_header
    %s9 = sphi 0, %s13
    %p10 = scmp.ge.s32.totalorder %s9, 4
    %s16 = sphi 0, %s35
    %s17 = sphi 0, %s31
    %s18 = sphi 0, %s27
    %s19 = sphi 0, %s16
    %s20 = sphi 0, %s17
    %s21 = sphi 0, %s18
    %s22 = sphi 0, %s19
    %s23 = sphi 0, %s20
    %s24 = sphi 0, %s21
    %s38 = sphi 0, %s40
    %s41 = sphi 0, %s38
    %s42 = sphi 0, %s41
    %s58 = sphi 0, %s42
    %s66 = sphi 0, %s68
    %s69 = sphi 0, %s66
    %s70 = sphi 0, %s69
    %s86 = sphi 0, %s70
    %s92 = sphi 0, %s94
    %s95 = sphi 0, %s92
    %s96 = sphi 0, %s95
    %s112 = sphi 0, %s96
    %s122 = sphi 0, %s124
    %s125 = sphi 0, %s122
    %s126 = sphi 0, %s125
    %s142 = sphi 0, %s126
  $region4: #{my_conv2d_forward.1} parent=0 // loop_header_branch
    %12 = sbr.rel (%p10) target = $region8
  $region5: #{my_conv2d_forward.1} parent=0 // loop_body
    %s14 = ssub.s32 %s9, 1
    %s15 = ssub.s32 %s9, 2
    %s25 = sadd.s32 1, %s18
    %p26 = scmp.ge.s32.totalorder %s25, 1
    %s27 = scalar_select %p26, 0, %s25
    %s28 = sadd.s32 1, %s17
    %s29 = scalar_select %p26, %s28, %s17
    %p30 = scmp.ge.s32.totalorder %s29, 1
    %s31 = scalar_select %p30, 0, %s29
    %s32 = sadd.s32 1, %s16
    %s33 = scalar_select %p30, %s32, %s16
    %p34 = scmp.ge.s32.totalorder %s33, 2
    %s35 = scalar_select %p34, 0, %s33
    %s36 = ssub.s32 %s17, %s31
    %p37 = scmp.eq.s32.totalorder %s36, 0
    %s39 = sadd.s32 %s38, 1
    %s40 = scalar_select %p37, %s38, %s39
    %p43 = pneg %p37
    %p44 = scmp.eq.s32.totalorder %s9, 1
    %p45 = por %p43, %p44
    %p46 = scmp.ne.s32.totalorder %s38, %s41
    %p47 = scmp.eq.s32.totalorder %s9, 0
    %p48 = por %p46, %p47
    %p49 = scmp.ne.s32.totalorder %s38, %s41
    %p50 = scmp.eq.s32.totalorder %s14, 1
    %p51 = por %p49, %p50
    %p52 = scmp.ne.s32.totalorder %s41, %s42
    %p53 = scmp.eq.s32.totalorder %s14, 0
    %p54 = por %p52, %p53
    %p55 = scmp.ne.s32.totalorder %s41, %s42
    %p56 = scmp.eq.s32.totalorder %s15, 1
    %p57 = por %p55, %p56
    %p59 = scmp.ne.s32.totalorder %s42, %s58
    %p60 = scmp.eq.s32.totalorder %s15, 0
    %p61 = por %p59, %p60
    %s62 = ssub.s32 %s16, %s35
    %s63 = ssub.s32 %s18, %s27
    %s64 = sor.u32 %s62, %s63
    %p65 = scmp.eq.s32.totalorder %s64, 0
    %s67 = sadd.s32 %s66, 1
    %s68 = scalar_select %p65, %s66, %s67
    %p71 = pneg %p65
    %p72 = scmp.eq.s32.totalorder %s9, 1
    %p73 = por %p71, %p72
    %p74 = scmp.ne.s32.totalorder %s66, %s69
    %p75 = scmp.eq.s32.totalorder %s9, 0
    %p76 = por %p74, %p75
    %p77 = scmp.ne.s32.totalorder %s66, %s69
    %p78 = scmp.eq.s32.totalorder %s14, 1
    %p79 = por %p77, %p78
    %p80 = scmp.ne.s32.totalorder %s69, %s70
    %p81 = scmp.eq.s32.totalorder %s14, 0
    %p82 = por %p80, %p81
    %p83 = scmp.ne.s32.totalorder %s69, %s70
    %p84 = scmp.eq.s32.totalorder %s15, 1
    %p85 = por %p83, %p84
    %p87 = scmp.ne.s32.totalorder %s70, %s86
    %p88 = scmp.eq.s32.totalorder %s15, 0
    %p89 = por %p87, %p88
    %s90 = ssub.s32 %s17, %s31
    %p91 = scmp.eq.s32.totalorder %s90, 0
    %s93 = sadd.s32 %s92, 1
    %s94 = scalar_select %p91, %s92, %s93
    %p97 = pneg %p91
    %p98 = scmp.eq.s32.totalorder %s9, 1
    %p99 = por %p97, %p98
    %p100 = scmp.ne.s32.totalorder %s92, %s95
    %p101 = scmp.eq.s32.totalorder %s9, 0
    %p102 = por %p100, %p101
    %p103 = scmp.ne.s32.totalorder %s92, %s95
    %p104 = scmp.eq.s32.totalorder %s14, 1
    %p105 = por %p103, %p104
    %p106 = scmp.ne.s32.totalorder %s95, %s96
    %p107 = scmp.eq.s32.totalorder %s14, 0
    %p108 = por %p106, %p107
    %p109 = scmp.ne.s32.totalorder %s95, %s96
    %p110 = scmp.eq.s32.totalorder %s15, 1
    %p111 = por %p109, %p110
    %p113 = scmp.ne.s32.totalorder %s96, %s112
    %p114 = scmp.eq.s32.totalorder %s15, 0
    %p115 = por %p113, %p114
    %s116 = ssub.s32 %s16, %s35
    %s117 = ssub.s32 %s17, %s31
    %s118 = sor.u32 %s116, %s117
    %s119 = ssub.s32 %s18, %s27
    %s120 = sor.u32 %s118, %s119
    %p121 = scmp.eq.s32.totalorder %s120, 0
    %s123 = sadd.s32 %s122, 1
    %s124 = scalar_select %p121, %s122, %s123
    %p127 = pneg %p121
    %p128 = scmp.eq.s32.totalorder %s9, 1
    %p129 = por %p127, %p128
    %p130 = scmp.ne.s32.totalorder %s122, %s125
    %p131 = scmp.eq.s32.totalorder %s9, 0
    %p132 = por %p130, %p131
    %p133 = scmp.ne.s32.totalorder %s122, %s125
    %p134 = scmp.eq.s32.totalorder %s14, 1
    %p135 = por %p133, %p134
    %p136 = scmp.ne.s32.totalorder %s125, %s126
    %p137 = scmp.eq.s32.totalorder %s14, 0
    %p138 = por %p136, %p137
    %p139 = scmp.ne.s32.totalorder %s125, %s126
    %p140 = scmp.eq.s32.totalorder %s15, 1
    %p141 = por %p139, %p140
    %p143 = scmp.ne.s32.totalorder %s126, %s142
    %p144 = scmp.eq.s32.totalorder %s15, 0
    %p145 = por %p143, %p144
    %p146 = scmp.le.s32.totalorder 1, %s9
    %p147 = scmp.lt.s32.totalorder %s9, 3
    %p148 = pnand %p146, %p147
    %p149 = pneg %p148
    // Predicated region
    $region9: #{my_conv2d_forward.1} parent=5 // pred_check
      _
    $region10: #{my_conv2d_forward.1} parent=5 // pred_check_branch
      %151 = sbr.rel (%p148) target = $region12
    $region11: #{my_conv2d_forward.1} parent=5 // pred_region
      %s152 = ssub.s32 %s9, 1
      // Predicated region
      $region13: #{my_conv2d_forward.1} parent=11 // pred_check
        %p153 = pneg %p54
      $region14: #{my_conv2d_forward.1} parent=11 // pred_check_branch
        %155 = sbr.rel (%p153) target = $region16
      $region15: #{my_conv2d_forward.1} parent=11 // pred_region
        %s156 = smul.u32 2, %s20
        %p157 = scmp.lt.s32.totalorder %s156, 1
        %s158 = scalar_select %p157, %s156, 1
        %s159 = smul.addr %s158, 4
        %s160 = scalar_lea.vmem %s0, %s159
        %s161 = smul.u32 2, %s20
      $region16: #{my_conv2d_forward.1} parent=11 // pred_fallthru
        _
      // Predicated region
      $region17: #{my_conv2d_forward.1} parent=11 // pred_check
        %p162 = pneg %p108
      $region18: #{my_conv2d_forward.1} parent=11 // pred_check_branch
        %164 = sbr.rel (%p162) target = $region20
      $region19: #{my_conv2d_forward.1} parent=11 // pred_region
        %s165 = smul.u32 2, %s20
        %p166 = scmp.lt.s32.totalorder %s165, 1
        %s167 = scalar_select %p166, %s165, 1
        %s168 = smul.addr %s167, 8
        %s169 = scalar_lea.vmem %s2, %s168
        %s170 = smul.u32 2, %s20
      $region20: #{my_conv2d_forward.1} parent=11 // pred_fallthru
        _
    $region12: #{my_conv2d_forward.1} parent=5 // pred_fallthru
      _
    %p171 = scmp.lt.s32.totalorder %s9, 2
    // Predicated region
    $region21: #{my_conv2d_forward.1} parent=5 // pred_check
      %p172 = pneg %p171
    $region22: #{my_conv2d_forward.1} parent=5 // pred_check_branch
      %174 = sbr.rel (%p172) target = $region24
    $region23: #{my_conv2d_forward.1} parent=5 // pred_region
      // Predicated region
      $region25: #{my_conv2d_forward.1} parent=23 // pred_check
        %p175 = pneg %p76
      $region26: #{my_conv2d_forward.1} parent=23 // pred_check_branch
        %177 = sbr.rel (%p175) target = $region28
      $region27: #{my_conv2d_forward.1} parent=23 // pred_region
        %p178 = scmp.lt.s32.totalorder %s16, 1
        %s179 = scalar_select %p178, %s16, 1
        %p180 = scmp.lt.s32.totalorder %s18, 0
        %s181 = scalar_select %p180, %s18, 0
        %s182 = smul.addr %s179, 16
        %s183 = sadd.s32 %s181, %s182
        %s184 = smul.addr %s183, 4
        %s185 = scalar_lea.vmem %s1, %s184
      $region28: #{my_conv2d_forward.1} parent=23 // pred_fallthru
        _
    $region24: #{my_conv2d_forward.1} parent=5 // pred_fallthru
      _
    %p186 = scmp.le.s32.totalorder 1, %s9
    %p187 = scmp.lt.s32.totalorder %s9, 3
    %p188 = pnand %p186, %p187
    %p189 = pneg %p188
    // Predicated region
    $region29: #{my_conv2d_forward.1} parent=5 // pred_check
      _
    $region30: #{my_conv2d_forward.1} parent=5 // pred_check_branch
      %191 = sbr.rel (%p188) target = $region32
    $region31: #{my_conv2d_forward.1} parent=5 // pred_region
      %s192 = ssub.s32 %s9, 1
      %s193 = smul.u32 2, %s20
      %p194 = scmp.lt.s32.totalorder %s193, 1
      %s195 = scalar_select %p194, %s193, 1
      %s196 = smul.addr %s195, 4
      %s197 = scalar_lea.vmem %s0, %s196
      %p198 = pneg %p54
      %p199 = pneg %p51
      %p200 = scmp.lt.s32.totalorder %s19, 1
      %s201 = scalar_select %p200, %s19, 1
      %p202 = scmp.lt.s32.totalorder %s21, 0
      %s203 = scalar_select %p202, %s21, 0
      %s204 = smul.addr %s201, 16
      %s205 = sadd.s32 %s203, %s204
      %s206 = smul.addr %s205, 4
      %s207 = scalar_lea.vmem %s1, %s206
      %p208 = pneg %p82
      %p209 = pneg %p79
      %s210 = smul.u32 2, %s20
      %p211 = scmp.lt.s32.totalorder %s210, 1
      %s212 = scalar_select %p211, %s210, 1
      %s213 = smul.addr %s212, 8
      %s214 = scalar_lea.vmem %s2, %s213
      %p215 = pneg %p108
      %p216 = pneg %p105
      %p217 = pneg %p138
      %p218 = pneg %p135
      %s219 = smul.u32 2, %s20
      %p220 = scmp.lt.s32.totalorder %s19, 1
      %s221 = scalar_select %p220, %s19, 1
      %p222 = scmp.lt.s32.totalorder %s219, 1
      %s223 = scalar_select %p222, %s219, 1
      %p224 = scmp.lt.s32.totalorder %s21, 0
      %s225 = scalar_select %p224, %s21, 0
      %s226 = sadd.s32 %s225, %s223
      %s227 = smul.addr %s221, 2
      %s228 = sadd.s32 %s226, %s227
      %s229 = smul.addr %s228, 8
      %s230 = scalar_lea.vmem %s3, %s229
      %s231 = smul.u32 2, %s20
      %p232 = scmp.lt.s32.totalorder %s231, 1
      %s233 = scalar_select %p232, %s231, 1
      %s234 = smul.addr %s233, 4
      %s235 = scalar_lea.vmem %s0, %s234
      %s236 = smul.u32 2, %s20
      %p237 = scmp.lt.s32.totalorder %s19, 1
      %s238 = scalar_select %p237, %s19, 1
      %p239 = scmp.lt.s32.totalorder %s21, 0
      %s240 = scalar_select %p239, %s21, 0
      %s241 = smul.addr %s238, 16
      %s242 = sadd.s32 %s240, %s241
      %s243 = smul.addr %s242, 4
      %s244 = scalar_lea.vmem %s1, %s243
      %s245 = smul.u32 2, %s20
      %p246 = scmp.lt.s32.totalorder %s245, 1
      %s247 = scalar_select %p246, %s245, 1
      %s248 = smul.addr %s247, 8
      %s249 = scalar_lea.vmem %s2, %s248
      %s250 = smul.u32 2, %s20
      %s251 = smul.u32 2, %s20
      %p252 = scmp.lt.s32.totalorder %s19, 1
      %s253 = scalar_select %p252, %s19, 1
      %p254 = scmp.lt.s32.totalorder %s251, 1
      %s255 = scalar_select %p254, %s251, 1
      %p256 = scmp.lt.s32.totalorder %s21, 0
      %s257 = scalar_select %p256, %s21, 0
      %s258 = sadd.s32 %s257, %s255
      %s259 = smul.addr %s253, 2
      %s260 = sadd.s32 %s258, %s259
      %s261 = smul.addr %s260, 8
      %s262 = scalar_lea.vmem %s3, %s261
      %s263 = smul.u32 2, %s20
      %v265 = vld [vmem:[%s235] sm:$0xf]
      %v266 = vld [vmem:[%s235 + $0x4] sm:$0xf]
      %v267 = vld [vmem:[%s244] sm:$0xf]
      %v268 = vld [vmem:[%s244 + $0x4] sm:$0xf]
      %v269 = vld [vmem:[%s244 + $0x8] sm:$0xf]
      %v270 = vld [vmem:[%s244 + $0xc] sm:$0xf]
      %v271 = vld [vmem:[%s244 + $0x10] sm:$0xf]
      %v272 = vld [vmem:[%s244 + $0x14] sm:$0xf]
      %v273 = vld [vmem:[%s244 + $0x18] sm:$0xf]
      %v274 = vld [vmem:[%s244 + $0x1c] sm:$0xf]
      %v275 = vld [vmem:[%s244 + $0x20] sm:$0xf]
      %v276 = vld [vmem:[%s244 + $0x24] sm:$0xf]
      %v277 = vld [vmem:[%s244 + $0x28] sm:$0xf]
      %v278 = vld [vmem:[%s244 + $0x2c] sm:$0xf]
      %v279 = vld [vmem:[%s244 + $0x30] sm:$0xf]
      %v280 = vld [vmem:[%s244 + $0x34] sm:$0xf]
      %v281 = vld [vmem:[%s244 + $0x38] sm:$0xf]
      %v282 = vld [vmem:[%s244 + $0x3c] sm:$0xf]
      %v283 = vld [vmem:[%s249] sm:$0xff]
      %v284 = vld [vmem:[%s249 + $0x8] sm:$0xff]
      %286 = vset.pattern.permute.xlu0 0
      %287 = vperm.xlu0 %286, %v283
      %v288 = vpop.permute.xlu0 %287
      %291 = vset.pattern.permute.xlu0 0
      %292 = vperm.xlu0 %291, %v284
      %v293 = vpop.permute.xlu0 %292
      %v297 = vunpack.c.l.b16 %v265
      %v298 = vunpack.c.l.b16 %v266
      %v299 = vpack.c.b16 %v298, %v297
      %v317 = vunpack.c.l.b16 %v267
      %v318 = vunpack.c.l.b16 %v268
      %v319 = vunpack.c.l.b16 %v269
      %v320 = vunpack.c.l.b16 %v270
      %v321 = vunpack.c.l.b16 %v271
      %v322 = vunpack.c.l.b16 %v272
      %v323 = vunpack.c.l.b16 %v273
      %v324 = vunpack.c.l.b16 %v274
      %v325 = vunpack.c.l.b16 %v275
      %v326 = vunpack.c.l.b16 %v276
      %v327 = vunpack.c.l.b16 %v277
      %v328 = vunpack.c.l.b16 %v278
      %v329 = vunpack.c.l.b16 %v279
      %v330 = vunpack.c.l.b16 %v280
      %v331 = vunpack.c.l.b16 %v281
      %v332 = vunpack.c.l.b16 %v282
      %v333 = vpack.c.b16 %v318, %v317
      %v334 = vpack.c.b16 %v320, %v319
      %v335 = vpack.c.b16 %v322, %v321
      %v336 = vpack.c.b16 %v324, %v323
      %v337 = vpack.c.b16 %v326, %v325
      %v338 = vpack.c.b16 %v328, %v327
      %v339 = vpack.c.b16 %v330, %v329
      %v340 = vpack.c.b16 %v332, %v331
      %349 = vmatprep.subr.bf16.mxu0 0
      %350 = vmatpush1.bf16.msra.mxu0 %v333
      %351 = vmatprep.subr.bf16.mxu0 0
      %352 = vmatpush1.bf16.msra.mxu0 %v334
      %353 = vmatprep.subr.bf16.mxu0 0
      %354 = vmatpush1.bf16.msra.mxu0 %v335
      %355 = vmatprep.subr.bf16.mxu0 0
      %356 = vmatpush1.bf16.msra.mxu0 %v336
      %357 = vmatprep.subr.bf16.mxu0 0
      %358 = vmatpush1.bf16.msra.mxu0 %v337
      %359 = vmatprep.subr.bf16.mxu0 0
      %360 = vmatpush1.bf16.msra.mxu0 %v338
      %361 = vmatprep.subr.bf16.mxu0 0
      %362 = vmatpush1.bf16.msra.mxu0 %v339
      %363 = vmatprep.subr.bf16.mxu0 0
      %364 = vmatpush1.bf16.msra.mxu0 %v340
      %365 = vmatprep.subr.bf16.mxu0 0
      %366 = vmatpush1.bf16.msra.mxu0 0
      %367 = vmatprep.subr.bf16.mxu0 0
      %368 = vmatpush1.bf16.msra.mxu0 0
      %369 = vmatprep.subr.bf16.mxu0 0
      %370 = vmatpush1.bf16.msra.mxu0 0
      %371 = vmatprep.subr.bf16.mxu0 0
      %372 = vmatpush1.bf16.msra.mxu0 0
      %373 = vmatprep.subr.bf16.mxu0 0
      %374 = vmatpush1.bf16.msra.mxu0 0
      %375 = vmatprep.subr.bf16.mxu0 0
      %376 = vmatpush1.bf16.msra.mxu0 0
      %377 = vmatprep.subr.bf16.mxu0 0
      %378 = vmatpush1.bf16.msra.mxu0 0
      %379 = vmatprep.subr.bf16.mxu0 0
      %380 = vmatpush1.bf16.msra.mxu0 0
      %381 = vmatprep.mubr.bf16.mxu0 0
      %382 = vmatmul.mubr.bf16.gmra.mrb[0].mxu0 %v299
      %v383 = vpop.f32.mrb[0].mxu0
      %v384 = vadd.f32 %v288, %v383
      %v385 = vpop.f32.mrb[0].mxu0
      %v386 = vpop.f32.mrb[0].mxu0
      %v387 = vadd.f32 %v293, %v386
      %v388 = vpop.f32.mrb[0].mxu0
      %389 = vdwg.mxu0
      %390 = vst [vmem:[%s262] sm:$0xff] %v384
      %391 = vst [vmem:[%s262 + $0x8] sm:$0xff] %v387
      %s392 = smul.u32 2, %s20
      %p393 = scmp.lt.s32.totalorder %s19, 1
      %s394 = scalar_select %p393, %s19, 1
      %p395 = scmp.lt.s32.totalorder %s392, 1
      %s396 = scalar_select %p395, %s392, 1
      %p397 = scmp.lt.s32.totalorder %s21, 0
      %s398 = scalar_select %p397, %s21, 0
      %s399 = sadd.s32 %s398, %s396
      %s400 = smul.addr %s394, 2
      %s401 = sadd.s32 %s399, %s400
      %s402 = smul.addr %s401, 8
      %s403 = scalar_lea.vmem %s3, %s402
      // Predicated region
      $region33: #{my_conv2d_forward.1} parent=31 // pred_check
        %p404 = pneg %p135
      $region34: #{my_conv2d_forward.1} parent=31 // pred_check_branch
        %406 = sbr.rel (%p404) target = $region36
      $region35: #{my_conv2d_forward.1} parent=31 // pred_region
        %s407 = smul.u32 2, %s20
      $region36: #{my_conv2d_forward.1} parent=31 // pred_fallthru
        _
    $region32: #{my_conv2d_forward.1} parent=5 // pred_fallthru
      _
    %p408 = scmp.le.s32.totalorder 2, %s9
    // Predicated region
    $region37: #{my_conv2d_forward.1} parent=5 // pred_check
      %p409 = pneg %p408
    $region38: #{my_conv2d_forward.1} parent=5 // pred_check_branch
      %411 = sbr.rel (%p409) target = $region40
    $region39: #{my_conv2d_forward.1} parent=5 // pred_region
      %s412 = ssub.s32 %s9, 2
      // Predicated region
      $region41: #{my_conv2d_forward.1} parent=39 // pred_check
        %p413 = pneg %p141
      $region42: #{my_conv2d_forward.1} parent=39 // pred_check_branch
        %415 = sbr.rel (%p413) target = $region44
      $region43: #{my_conv2d_forward.1} parent=39 // pred_region
        %s416 = smul.u32 2, %s23
        %p417 = scmp.lt.s32.totalorder %s22, 1
        %s418 = scalar_select %p417, %s22, 1
        %p419 = scmp.lt.s32.totalorder %s416, 1
        %s420 = scalar_select %p419, %s416, 1
        %p421 = scmp.lt.s32.totalorder %s24, 0
        %s422 = scalar_select %p421, %s24, 0
        %s423 = sadd.s32 %s422, %s420
        %s424 = smul.addr %s418, 2
        %s425 = sadd.s32 %s423, %s424
        %s426 = smul.addr %s425, 8
        %s427 = scalar_lea.vmem %s3, %s426
      $region44: #{my_conv2d_forward.1} parent=39 // pred_fallthru
        _
    $region40: #{my_conv2d_forward.1} parent=5 // pred_fallthru
      _
  $region6: #{my_conv2d_forward.1} parent=0 // loop_footer
    %s13 = sadd.s32 1, %s9
  $region7: #{my_conv2d_forward.1} parent=0 // loop_footer_branch
    %8 = sbr.rel target = $region3
  $region8: #{my_conv2d_forward.1} parent=0 // loop_exit
    _

</llo_original>
